<compile_context>
chip_gen: v5e
topology: v5e:2x2
jax: 0.10.0
libtpu: 0.0.40
codegen_flags: <defaults>
</compile_context>

<pallas_src>
import functools
import math

import jax
import jax.numpy as jnp
from jax import lax
from jax.experimental import pallas as pl
from jax.experimental.pallas import tpu as pltpu


_SQRT_HALF = 1.0 / math.sqrt(2.0)


def _activation(x, kind):
    if kind == "gelu":
        # PyTorch nn.functional.gelu default = exact (erf-based) gelu.
        return 0.5 * x * (1.0 + lax.erf(x * _SQRT_HALF))
    elif kind == "relu":
        return jnp.maximum(x, 0.0)
    raise ValueError(f"unknown activation: {kind}")


def _round_up(x, n):
    return ((x + n - 1) // n) * n


# ----------------------------- fused kernel --------------------------------
def _act_kernel(q_ref, v_ref, o_ref, *, activation_fn):
    # Leading entry axis is Squeezed away by the BlockSpec:
    #   q_ref: (d_pad, d_pad)   v_ref / o_ref: (d_pad, m_pad)
    q = q_ref[...]
    v = v_ref[...]
    # h = act(Q^T @ v) -- contract q's axis 0 directly (no in-kernel transpose).
    h = lax.dot_general(
        q, v,
        dimension_numbers=(((0,), (0,)), ((), ())),
        preferred_element_type=jnp.float32,
        precision=lax.Precision.HIGHEST,
    )
    h = _activation(h, activation_fn)  # f32 elementwise (VPU/EUP)
    out = jnp.dot(q, h,
                  preferred_element_type=jnp.float32,
                  precision=lax.Precision.HIGHEST)
    o_ref[...] = out.astype(o_ref.dtype)


def _batched_forward(q_stack, v_stack, activation_fn):
    # q_stack: (E, d_pad, d_pad) f32,  v_stack: (E, d_pad, m_pad) f32
    E, d_pad, _ = q_stack.shape
    m_pad = v_stack.shape[-1]
    kernel = functools.partial(_act_kernel, activation_fn=activation_fn)
    return pl.pallas_call(
        kernel,
        out_shape=jax.ShapeDtypeStruct((E, d_pad, m_pad), v_stack.dtype),
        grid=(E,),
        in_specs=[
            pl.BlockSpec((pl.Squeezed(), d_pad, d_pad), lambda e: (e, 0, 0)),
            pl.BlockSpec((pl.Squeezed(), d_pad, m_pad), lambda e: (e, 0, 0)),
        ],
        out_specs=pl.BlockSpec((pl.Squeezed(), d_pad, m_pad), lambda e: (e, 0, 0)),
        compiler_params=pltpu.CompilerParams(
            dimension_semantics=("parallel",),
        ),
    )(q_stack, v_stack)


# ------------------------------ module port --------------------------------
class Activation:
    """JAX/Pallas port of the PyTorch `Activation` module.

    All dict entries are executed in a single fused pallas_call (one launch,
    one compilation) instead of one tiny custom call per key.
    """

    def __init__(self, mult, activation_fn, D12_Q, dtype=jnp.float32):
        if activation_fn not in ("gelu", "relu"):
            raise ValueError(activation_fn)
        self.mult = mult
        self.activation_fn = activation_fn
        self.dtype = dtype
        # Frozen (non-trainable) parameters, like the PyTorch ParameterDict.
        self.Q = {k: jnp.asarray(v, dtype=dtype) for k, v in D12_Q.items()}
        self._dims = {k: q.shape[0] for k, q in self.Q.items()}
        # Pad every Q ONCE at init to a common, sublane-aligned d_pad.
        self._d_pad = max(8, _round_up(max(self._dims.values()), 8))
        self._Q_pad = {}
        for k, q in self.Q.items():
            d = q.shape[0]
            self._Q_pad[k] = jnp.pad(
                q, ((0, self._d_pad - d), (0, self._d_pad - d)))

    def __call__(self, D12_vec):
        keys = list(D12_vec.keys())
        d_pad = self._d_pad
        m_sizes = {k: D12_vec[k].shape[1] for k in keys}
        # Lane-dense output: pad the vector batch axis to a multiple of 128.
        m_pad = max(128, _round_up(max(m_sizes.values()), 128))

        q_stack = jnp.stack([self._Q_pad[k] for k in keys])        # (E, d_pad, d_pad)
        v_stack = jnp.stack([
            jnp.pad(jnp.asarray(D12_vec[k], dtype=self.dtype),
                    ((0, d_pad - self._dims[k]), (0, m_pad - m_sizes[k])))
            for k in keys
        ])                                                         # (E, d_pad, m_pad)

        out_stack = _batched_forward(q_stack, v_stack, self.activation_fn)

        # Slice back to the original per-key shapes (padding is exactly zero).
        return {
            k: out_stack[i, : self._dims[k], : m_sizes[k]]
            for i, k in enumerate(keys)
        }


# -------------------- pure-JAX reference for a sanity check ----------------
def _ref_forward(Q, vec, activation_fn):
    out = {}
    for k, v in vec.items():
        h = _activation(
            jnp.matmul(Q[k].T, v, precision=lax.Precision.HIGHEST),
            activation_fn)
        out[k] = jnp.matmul(Q[k], h, precision=lax.Precision.HIGHEST)
    return out


if __name__ == "__main__":
    key = jax.random.PRNGKey(0)

    # Deterministic synthetic D12_Q: a couple of (d, d) basis matrices.
    dims = {"irrep_0": 32, "irrep_1": 16}
    D12_Q = {}
    for i, (k, d) in enumerate(dims.items()):
        kq = jax.random.fold_in(key, i)
        D12_Q[k] = jax.random.normal(kq, (d, d), dtype=jnp.float32) / math.sqrt(d)

    # Input dict of vectors: (d, m) with m = 8 columns per key.
    m = 8
    D12_vec = {}
    for i, (k, d) in enumerate(dims.items()):
        kv = jax.random.fold_in(key, 100 + i)
        D12_vec[k] = jax.random.normal(kv, (d, m), dtype=jnp.float32)

    module = Activation(mult=1, activation_fn="gelu", D12_Q=D12_Q)
    out = module(D12_vec)
    out = {k: jax.block_until_ready(v) for k, v in out.items()}

    ref = _ref_forward(module.Q, D12_vec, "gelu")
    for k in out:
        assert out[k].shape == D12_vec[k].shape, (k, out[k].shape)
        err = float(jnp.max(jnp.abs(out[k] - ref[k])))
        assert err < 1e-4, f"mismatch for {k}: {err}"

    # Also exercise relu path once (same fused kernel, different activation).
    module_relu = Activation(mult=1, activation_fn="relu", D12_Q=D12_Q)
    out_relu = {k: jax.block_until_ready(v)
                for k, v in module_relu(D12_vec).items()}
    ref_relu = _ref_forward(module_relu.Q, D12_vec, "relu")
    for k in out_relu:
        err = float(jnp.max(jnp.abs(out_relu[k] - ref_relu[k])))
        assert err < 1e-4, f"relu mismatch for {k}: {err}"

    print("KERNEL_OK")
</pallas_src>

<mosaic_0001>
module attributes {stable_mosaic.version = 11 : i64} {
  func.func @_act_kernel(%arg0: i32, %arg1: memref<1x32x32xf32, #tpu.memory_space<vmem>>, %arg2: memref<1x32x128xf32, #tpu.memory_space<vmem>>, %arg3: memref<1x32x128xf32, #tpu.memory_space<vmem>>) attributes {dimension_semantics = [#tpu.dimension_semantics<parallel>], iteration_bounds = array<i64: 2>, scalar_prefetch = 0 : i64, scratch_operands = 0 : i64, tpu.core_type = #tpu.core_type<tc>, window_params = [{transform_indices = @transform_0, window_bounds = array<i64: 1, 32, 32>}, {transform_indices = @transform_1, window_bounds = array<i64: 1, 32, 128>}, {transform_indices = @transform_2, window_bounds = array<i64: 1, 32, 128>}]} {
    %c0 = arith.constant 0 : index
    %c0_0 = arith.constant 0 : index
    %c0_1 = arith.constant 0 : index
    %0 = vector.load %arg1[%c0, %c0_0, %c0_1] : memref<1x32x32xf32, #tpu.memory_space<vmem>>, vector<1x32x32xf32>
    %1 = vector.shape_cast %0 : vector<1x32x32xf32> to vector<32x32xf32>
    %c0_2 = arith.constant 0 : index
    %c0_3 = arith.constant 0 : index
    %c0_4 = arith.constant 0 : index
    %2 = vector.load %arg2[%c0_2, %c0_3, %c0_4] : memref<1x32x128xf32, #tpu.memory_space<vmem>>, vector<1x32x128xf32>
    %3 = vector.shape_cast %2 : vector<1x32x128xf32> to vector<32x128xf32>
    %cst = arith.constant dense<0.000000e+00> : vector<32x128xf32>
    %4 = tpu.matmul %1, %3, %cst {dimension_numbers = #tpu.dot_dimension_numbers<[0], [0], [1], [1], [0, 1, 1, 1], [], []>, precision = #tpu.contract_precision<fp32>} : vector<32x32xf32>, vector<32x128xf32>, vector<32x128xf32> -> vector<32x128xf32>
    %cst_5 = arith.constant 5.000000e-01 : f32
    %5 = vector.broadcast %cst_5 : f32 to vector<32x128xf32>
    %6 = arith.mulf %5, %4 : vector<32x128xf32>
    %cst_6 = arith.constant 0.707106769 : f32
    %7 = vector.broadcast %cst_6 : f32 to vector<32x128xf32>
    %8 = arith.mulf %4, %7 : vector<32x128xf32>
    %9 = math.erf %8 : vector<32x128xf32>
    %cst_7 = arith.constant 1.000000e+00 : f32
    %10 = vector.broadcast %cst_7 : f32 to vector<32x128xf32>
    %11 = arith.addf %10, %9 : vector<32x128xf32>
    %12 = arith.mulf %6, %11 : vector<32x128xf32>
    %cst_8 = arith.constant dense<0.000000e+00> : vector<32x128xf32>
    %13 = tpu.matmul %1, %12, %cst_8 {dimension_numbers = #tpu.dot_dimension_numbers<[1], [0], [0], [1], [0, 0, 1, 1], [], []>, precision = #tpu.contract_precision<fp32>} : vector<32x32xf32>, vector<32x128xf32>, vector<32x128xf32> -> vector<32x128xf32>
    %c0_9 = arith.constant 0 : index
    %c0_10 = arith.constant 0 : index
    %c0_11 = arith.constant 0 : index
    %14 = vector.load %arg3[%c0_9, %c0_10, %c0_11] : memref<1x32x128xf32, #tpu.memory_space<vmem>>, vector<1x32x128xf32>
    %15 = vector.shape_cast %14 : vector<1x32x128xf32> to vector<32x128xf32>
    %16 = vector.shape_cast %13 : vector<32x128xf32> to vector<1x32x128xf32>
    tpu.vector_store %arg3[%c0_9, %c0_10, %c0_11], %16 {strides = array<i32>} : memref<1x32x128xf32, #tpu.memory_space<vmem>>, vector<1x32x128xf32>,
    return
  }
  func.func @transform_0(%arg0: i32) -> (i32, i32, i32) {
    %c0_i32 = arith.constant 0 : i32
    %c0_i32_0 = arith.constant 0 : i32
    %c0_i32_1 = arith.constant 0 : i32
    return %arg0, %c0_i32, %c0_i32_0 : i32, i32, i32
  }
  func.func @transform_1(%arg0: i32) -> (i32, i32, i32) {
    %c0_i32 = arith.constant 0 : i32
    %c0_i32_0 = arith.constant 0 : i32
    %c0_i32_1 = arith.constant 0 : i32
    return %arg0, %c0_i32, %c0_i32_0 : i32, i32, i32
  }
  func.func @transform_2(%arg0: i32) -> (i32, i32, i32) {
    %c0_i32 = arith.constant 0 : i32
    %c0_i32_0 = arith.constant 0 : i32
    %c0_i32_1 = arith.constant 0 : i32
    return %arg0, %c0_i32, %c0_i32_0 : i32, i32, i32
  }
}

</mosaic_0001>

<llo_original>
// kernel: tpu_custom_call.1
$region0: #{tpu_custom_call.1}
  #allocation0 [shape = 'u32[]', space=smem, size = 0x4, offset = 0x4, fixed_abs, tag = 'smem constant byte address 0x4 - core index']
  #allocation1 [shape = 'u32[72,128]{1,0:T(1,128)}', space=vmem, size = 0x9000, scoped, tag = 'internal scratch']
  %s0 = inlined_call_operand.hbm [shape: f32[2,32,32], index: 0, kind: input, shape index: {}]
  %s1 = inlined_call_operand.hbm [shape: f32[2,32,128], index: 1, kind: input, shape index: {}]
  %s2 = inlined_call_operand.hbm [shape: f32[2,32,128], index: 2, kind: output, shape index: {}]
  %s3 = sld [smem:[#allocation0]]
  $region49: #{tpu_custom_call.1} parent=0
    _
  %s5 = ssub.s32 1, %s3
  %s6 = scalar_select 0, %s5, %s3
  $region1: #{tpu_custom_call.1} parent=0
    #allocation2 [shape = 'u8[32768]{0}', space=vmem, size = 0x8000, scoped, tag = 'input window, operand 0']
    #allocation3 [shape = 's32[2]{0}', space=sflag, size = 0x8, scoped, tag = 'scoped memory for tpu_custom_call.1']
    #allocation4 [shape = 's32[2]{0}', space=sflag, size = 0x8, scoped, tag = 'scoped memory for tpu_custom_call.1']
    #allocation5 [shape = 'u8[32768]{0}', space=vmem, size = 0x8000, scoped, tag = 'input window, operand 1']
    #allocation6 [shape = 's32[2]{0}', space=sflag, size = 0x8, scoped, tag = 'scoped memory for tpu_custom_call.1']
    #allocation7 [shape = 'u8[32768]{0}', space=vmem, size = 0x8000, scoped, tag = 'output window, operand 0']
    %7 = vsyncpa [#allocation3], 0
    %s8 = scalar_lea.sflag [#allocation3], 1
    %9 = vsyncpa %s8, 0
    %10 = vsyncpa [#allocation6], 0
    %s11 = scalar_lea.sflag [#allocation6], 1
    %12 = vsyncpa %s11, 0
    %13 = vsyncpa [#allocation4], 0
    %s14 = scalar_lea.sflag [#allocation4], 1
    %15 = vsyncpa %s14, 0
    loop: start=0, step=1, limit=4
    $region2: #{tpu_custom_call.1} parent=1 // loop_pre_header
      _
    $region3: #{tpu_custom_call.1} parent=1 // loop_header
      %s17 = sphi 0, %s21
      %p18 = scmp.ge.s32.totalorder %s17, 4
      %s27 = sphi 0, %s29
      %s30 = sphi 0, %s27
      %s31 = sphi 0, %s30
      %s47 = sphi 0, %s31
      %s53 = sphi 0, %s55
      %s56 = sphi 0, %s53
      %s57 = sphi 0, %s56
      %s73 = sphi 0, %s57
      %s79 = sphi 0, %s81
      %s82 = sphi 0, %s79
      %s83 = sphi 0, %s82
      %s99 = sphi 0, %s83
    $region4: #{tpu_custom_call.1} parent=1 // loop_header_branch
      %20 = sbr.rel (%p18) target = $region8
    $region5: #{tpu_custom_call.1} parent=1 // loop_body
      %s22 = ssub.s32 %s17, 1
      %s23 = ssub.s32 %s17, 2
      %s24 = sadd.s32 %s17, 1
      %s25 = ssub.s32 %s17, %s24
      %p26 = scmp.eq.s32.totalorder %s25, 0
      %s28 = sadd.s32 %s27, 1
      %s29 = scalar_select %p26, %s27, %s28
      %p32 = pneg %p26
      %p33 = scmp.eq.s32.totalorder %s17, 1
      %p34 = por %p32, %p33
      %p35 = scmp.ne.s32.totalorder %s27, %s30
      %p36 = scmp.eq.s32.totalorder %s17, 0
      %p37 = por %p35, %p36
      %p38 = scmp.ne.s32.totalorder %s27, %s30
      %p39 = scmp.eq.s32.totalorder %s22, 1
      %p40 = por %p38, %p39
      %p41 = scmp.ne.s32.totalorder %s30, %s31
      %p42 = scmp.eq.s32.totalorder %s22, 0
      %p43 = por %p41, %p42
      %p44 = scmp.ne.s32.totalorder %s30, %s31
      %p45 = scmp.eq.s32.totalorder %s23, 1
      %p46 = por %p44, %p45
      %p48 = scmp.ne.s32.totalorder %s31, %s47
      %p49 = scmp.eq.s32.totalorder %s23, 0
      %p50 = por %p48, %p49
      %s51 = ssub.s32 %s17, %s24
      %p52 = scmp.eq.s32.totalorder %s51, 0
      %s54 = sadd.s32 %s53, 1
      %s55 = scalar_select %p52, %s53, %s54
      %p58 = pneg %p52
      %p59 = scmp.eq.s32.totalorder %s17, 1
      %p60 = por %p58, %p59
      %p61 = scmp.ne.s32.totalorder %s53, %s56
      %p62 = scmp.eq.s32.totalorder %s17, 0
      %p63 = por %p61, %p62
      %p64 = scmp.ne.s32.totalorder %s53, %s56
      %p65 = scmp.eq.s32.totalorder %s22, 1
      %p66 = por %p64, %p65
      %p67 = scmp.ne.s32.totalorder %s56, %s57
      %p68 = scmp.eq.s32.totalorder %s22, 0
      %p69 = por %p67, %p68
      %p70 = scmp.ne.s32.totalorder %s56, %s57
      %p71 = scmp.eq.s32.totalorder %s23, 1
      %p72 = por %p70, %p71
      %p74 = scmp.ne.s32.totalorder %s57, %s73
      %p75 = scmp.eq.s32.totalorder %s23, 0
      %p76 = por %p74, %p75
      %s77 = ssub.s32 %s17, %s24
      %p78 = scmp.eq.s32.totalorder %s77, 0
      %s80 = sadd.s32 %s79, 1
      %s81 = scalar_select %p78, %s79, %s80
      %p84 = pneg %p78
      %p85 = scmp.eq.s32.totalorder %s17, 1
      %p86 = por %p84, %p85
      %p87 = scmp.ne.s32.totalorder %s79, %s82
      %p88 = scmp.eq.s32.totalorder %s17, 0
      %p89 = por %p87, %p88
      %p90 = scmp.ne.s32.totalorder %s79, %s82
      %p91 = scmp.eq.s32.totalorder %s22, 1
      %p92 = por %p90, %p91
      %p93 = scmp.ne.s32.totalorder %s82, %s83
      %p94 = scmp.eq.s32.totalorder %s22, 0
      %p95 = por %p93, %p94
      %p96 = scmp.ne.s32.totalorder %s82, %s83
      %p97 = scmp.eq.s32.totalorder %s23, 1
      %p98 = por %p96, %p97
      %p100 = scmp.ne.s32.totalorder %s83, %s99
      %p101 = scmp.eq.s32.totalorder %s23, 0
      %p102 = por %p100, %p101
      %p103 = scmp.le.s32.totalorder 1, %s17
      %p104 = scmp.lt.s32.totalorder %s17, 3
      %p105 = pnand %p103, %p104
      %p106 = pneg %p105
      // Predicated region
      $region9: #{tpu_custom_call.1} parent=5 // pred_check
        _
      $region10: #{tpu_custom_call.1} parent=5 // pred_check_branch
        %108 = sbr.rel (%p105) target = $region12
      $region11: #{tpu_custom_call.1} parent=5 // pred_region
        %s109 = ssub.s32 %s17, 1
      $region12: #{tpu_custom_call.1} parent=5 // pred_fallthru
        _
      %p110 = scmp.lt.s32.totalorder %s17, 2
      // Predicated region
      $region13: #{tpu_custom_call.1} parent=5 // pred_check
        %p111 = pneg %p110
      $region14: #{tpu_custom_call.1} parent=5 // pred_check_branch
        %113 = sbr.rel (%p111) target = $region16
      $region15: #{tpu_custom_call.1} parent=5 // pred_region
        // Predicated region
        $region17: #{tpu_custom_call.1} parent=15 // pred_check
          %p114 = pneg %p37
        $region18: #{tpu_custom_call.1} parent=15 // pred_check_branch
          %116 = sbr.rel (%p114) target = $region20
        $region19: #{tpu_custom_call.1} parent=15 // pred_region
          %s117 = sand.u32 %s27, 1
          %s118 = scalar_lea.sflag [#allocation3], %s117
          %s119 = sand.u32 %s27, 1
          %s120 = smul.addr %s119, 32
          %s121 = scalar_lea.vmem [#allocation2], %s120
          %123 = vsyncadd %s118, 0
          %s124 = smul.addr %s17, 4
          %s125 = smul.addr %s124, 8
          %s126 = scalar_lea.hbm %s0, %s125
          %s127 = sshll.u32 %s126, 4
          %s128 = int_to_ptr.hbm [resolvable:$true] %s127
          %s129 = sshll.u32 %s121, 4
          %s130 = int_to_ptr.vmem [resolvable:$true] %s129
          %135 = dma.hbm_to_vmem [thread:$0]  %s128, 512, %s130, %s118, 128, 128, 8
        $region20: #{tpu_custom_call.1} parent=15 // pred_fallthru
          _
        // Predicated region
        $region21: #{tpu_custom_call.1} parent=15 // pred_check
          %p136 = pneg %p63
        $region22: #{tpu_custom_call.1} parent=15 // pred_check_branch
          %138 = sbr.rel (%p136) target = $region24
        $region23: #{tpu_custom_call.1} parent=15 // pred_region
          %s139 = sand.u32 %s53, 1
          %s140 = scalar_lea.sflag [#allocation6], %s139
          %s141 = sand.u32 %s53, 1
          %s142 = smul.addr %s141, 32
          %s143 = scalar_lea.vmem [#allocation5], %s142
          %145 = vsyncadd %s140, 0
          %s146 = smul.addr %s17, 4
          %s147 = smul.addr %s146, 8
          %s148 = scalar_lea.hbm %s1, %s147
          %s149 = sshll.u32 %s148, 4
          %s150 = int_to_ptr.hbm [resolvable:$true] %s149
          %s151 = sshll.u32 %s143, 4
          %s152 = int_to_ptr.vmem [resolvable:$true] %s151
          %157 = dma.hbm_to_vmem [thread:$0]  %s150, 512, %s152, %s140, 128, 128, 8
        $region24: #{tpu_custom_call.1} parent=15 // pred_fallthru
          _
      $region16: #{tpu_custom_call.1} parent=5 // pred_fallthru
        _
      %p158 = scmp.le.s32.totalorder 1, %s17
      %p159 = scmp.lt.s32.totalorder %s17, 3
      %p160 = pnand %p158, %p159
      %p161 = pneg %p160
      // Predicated region
      $region25: #{tpu_custom_call.1} parent=5 // pred_check
        _
      $region26: #{tpu_custom_call.1} parent=5 // pred_check_branch
        %163 = sbr.rel (%p160) target = $region28
      $region27: #{tpu_custom_call.1} parent=5 // pred_region
        %s164 = ssub.s32 %s17, 1
        %s165 = sand.u32 %s30, 1
        %s166 = scalar_lea.sflag [#allocation3], %s165
        %s167 = sand.u32 %s30, 1
        %s168 = smul.addr %s167, 32
        %s169 = scalar_lea.vmem [#allocation2], %s168
        // Predicated region
        $region29: #{tpu_custom_call.1} parent=27 // pred_check
          %p170 = pneg %p43
        $region30: #{tpu_custom_call.1} parent=27 // pred_check_branch
          %172 = sbr.rel (%p170) target = $region32
        $region31: #{tpu_custom_call.1} parent=27 // pred_region
          %174 = dma.done %s166, 512
        $region32: #{tpu_custom_call.1} parent=27 // pred_fallthru
          _
        %s175 = sand.u32 %s56, 1
        %s176 = scalar_lea.sflag [#allocation6], %s175
        %s177 = sand.u32 %s56, 1
        %s178 = smul.addr %s177, 32
        %s179 = scalar_lea.vmem [#allocation5], %s178
        // Predicated region
        $region33: #{tpu_custom_call.1} parent=27 // pred_check
          %p180 = pneg %p69
        $region34: #{tpu_custom_call.1} parent=27 // pred_check_branch
          %182 = sbr.rel (%p180) target = $region36
        $region35: #{tpu_custom_call.1} parent=27 // pred_region
          %184 = dma.done %s176, 512
        $region36: #{tpu_custom_call.1} parent=27 // pred_fallthru
          _
        %s185 = sand.u32 %s30, 1
        %s186 = scalar_lea.sflag [#allocation3], %s185
        %s187 = sand.u32 %s30, 1
        %s188 = smul.addr %s187, 32
        %s189 = scalar_lea.vmem [#allocation2], %s188
        %p190 = pneg %p43
        %p191 = pneg %p40
        %s192 = sand.u32 %s56, 1
        %s193 = scalar_lea.sflag [#allocation6], %s192
        %s194 = sand.u32 %s56, 1
        %s195 = smul.addr %s194, 32
        %s196 = scalar_lea.vmem [#allocation5], %s195
        %p197 = pneg %p69
        %p198 = pneg %p66
        %p199 = pneg %p95
        %p200 = pneg %p92
        %s201 = sand.u32 %s82, 1
        %s202 = scalar_lea.sflag [#allocation4], %s201
        %s203 = sand.u32 %s82, 1
        %s204 = smul.addr %s203, 32
        %s205 = scalar_lea.vmem [#allocation7], %s204
        %v206 = vld [vmem:[%s169] sm:$0xff]
        %v207 = vld [vmem:[%s169 + $0x8] sm:$0xff]
        %v208 = vld [vmem:[%s169 + $0x10] sm:$0xff]
        %v209 = vld [vmem:[%s169 + $0x18] sm:$0xff]
        %v210 = vld [vmem:[%s179] sm:$0xff]
        %v211 = vld [vmem:[%s179 + $0x8] sm:$0xff]
        %v212 = vld [vmem:[%s179 + $0x10] sm:$0xff]
        %v213 = vld [vmem:[%s179 + $0x18] sm:$0xff]
        %214 = vxpose.xlu0.b32.start [1/16] %v206, 128
        %215 = vxpose.xlu0.b32.cont [2/16] %v207, 128
        %216 = vxpose.xlu0.b32.cont [3/16] %v208, 128
        %217 = vxpose.xlu0.b32.cont [4/16] %v209, 128
        %218 = vxpose.xlu0.b32.cont [5/16] 0.0, 128
        %219 = vxpose.xlu0.b32.cont [6/16] 0.0, 128
        %220 = vxpose.xlu0.b32.cont [7/16] 0.0, 128
        %221 = vxpose.xlu0.b32.cont [8/16] 0.0, 128
        %222 = vxpose.xlu0.b32.cont [9/16] 0.0, 128
        %223 = vxpose.xlu0.b32.cont [10/16] 0.0, 128
        %224 = vxpose.xlu0.b32.cont [11/16] 0.0, 128
        %225 = vxpose.xlu0.b32.cont [12/16] 0.0, 128
        %226 = vxpose.xlu0.b32.cont [13/16] 0.0, 128
        %227 = vxpose.xlu0.b32.cont [14/16] 0.0, 128
        %228 = vxpose.xlu0.b32.cont [15/16] 0.0, 128
        %229 = vxpose.xlu0.b32.end [16/16] 0.0, 128
        %v230 = vpop.trf.xlu0
        %v231 = vpop.trf.xlu0
        %v232 = vpop.trf.xlu0
        %v233 = vpop.trf.xlu0
        %v234 = vpop.trf.xlu0
        %v235 = vpop.trf.xlu0
        %v236 = vpop.trf.xlu0
        %v237 = vpop.trf.xlu0
        %v238 = vpop.trf.xlu0
        %v239 = vpop.trf.xlu0
        %v240 = vpop.trf.xlu0
        %v241 = vpop.trf.xlu0
        %v242 = vpop.trf.xlu0
        %v243 = vpop.trf.xlu0
        %v244 = vpop.trf.xlu0
        %v245 = vpop.trf.xlu0
        %vm246 = vcmask 261120
        %v248 = vsel %vm246, %v230, 0
        %v251 = vsel %vm246, %v231, 0
        %v254 = vsel %vm246, %v232, 0
        %v257 = vsel %vm246, %v233, 0
        %259 = vmatpush.msra.mxu0 0.0
        %260 = vmatpush.msra.mxu0 0.0
        %261 = vmatpush.msra.mxu0 0.0
        %262 = vmatpush.msra.mxu0 0.0
        %263 = vmatpush.msra.mxu0 0.0
        %264 = vmatpush.msra.mxu0 0.0
        %265 = vmatpush.msra.mxu0 0.0
        %266 = vmatpush.msra.mxu0 0.0
        %267 = vmatpush.msra.mxu0 0.0
        %268 = vmatpush.msra.mxu0 0.0
        %269 = vmatpush.msra.mxu0 0.0
        %270 = vmatpush.msra.mxu0 0.0
        %v271 = vand.u32 %v213, 4294901760
        %272 = vmatpush.msra.mxu0 %v271
        %v273 = vand.u32 %v212, 4294901760
        %274 = vmatpush.msra.mxu0 %v273
        %v275 = vand.u32 %v211, 4294901760
        %276 = vmatpush.msra.mxu0 %v275
        %v277 = vand.u32 %v210, 4294901760
        %278 = vmatpush.msra.mxu0 %v277
        %v279 = vand.u32 %v248, 4294901760
        %v280 = vsub.f32 %v248, %v279
        %v281 = vand.u32 %v280, 4294901760
        %v282 = vsub.f32 %v280, %v281
        %v283 = vand.u32 %v282, 4294901760
        %284 = vmatmul.f32.gmra.mxu0 %v283
        %v285 = vpop.f32.mrf.mxu0
        %v286 = vadd.f32 0.0, %v285
        %v287 = vand.u32 %v251, 4294901760
        %v288 = vsub.f32 %v251, %v287
        %v289 = vand.u32 %v288, 4294901760
        %v290 = vsub.f32 %v288, %v289
        %v291 = vand.u32 %v290, 4294901760
        %292 = vmatmul.f32.gmra.mxu0 %v291
        %v293 = vpop.f32.mrf.mxu0
        %v294 = vadd.f32 0.0, %v293
        %v295 = vand.u32 %v254, 4294901760
        %v296 = vsub.f32 %v254, %v295
        %v297 = vand.u32 %v296, 4294901760
        %v298 = vsub.f32 %v296, %v297
        %v299 = vand.u32 %v298, 4294901760
        %300 = vmatmul.f32.gmra.mxu0 %v299
        %v301 = vpop.f32.mrf.mxu0
        %v302 = vadd.f32 0.0, %v301
        %v303 = vand.u32 %v257, 4294901760
        %v304 = vsub.f32 %v257, %v303
        %v305 = vand.u32 %v304, 4294901760
        %v306 = vsub.f32 %v304, %v305
        %v307 = vand.u32 %v306, 4294901760
        %308 = vmatmul.f32.gmra.mxu0 %v307
        %v309 = vpop.f32.mrf.mxu0
        %v310 = vadd.f32 0.0, %v309
        %311 = vdwg.mxu0
        %312 = vmatpush.msra.mxu0 0.0
        %313 = vmatpush.msra.mxu0 0.0
        %314 = vmatpush.msra.mxu0 0.0
        %315 = vmatpush.msra.mxu0 0.0
        %316 = vmatpush.msra.mxu0 0.0
        %317 = vmatpush.msra.mxu0 0.0
        %318 = vmatpush.msra.mxu0 0.0
        %319 = vmatpush.msra.mxu0 0.0
        %320 = vmatpush.msra.mxu0 0.0
        %321 = vmatpush.msra.mxu0 0.0
        %322 = vmatpush.msra.mxu0 0.0
        %323 = vmatpush.msra.mxu0 0.0
        %v324 = vand.u32 %v213, 4294901760
        %v325 = vsub.f32 %v213, %v324
        %v326 = vand.u32 %v325, 4294901760
        %v327 = vsub.f32 %v325, %v326
        %v328 = vand.u32 %v327, 4294901760
        %329 = vmatpush.msra.mxu0 %v328
        %v330 = vand.u32 %v212, 4294901760
        %v331 = vsub.f32 %v212, %v330
        %v332 = vand.u32 %v331, 4294901760
        %v333 = vsub.f32 %v331, %v332
        %v334 = vand.u32 %v333, 4294901760
        %335 = vmatpush.msra.mxu0 %v334
        %v336 = vand.u32 %v211, 4294901760
        %v337 = vsub.f32 %v211, %v336
        %v338 = vand.u32 %v337, 4294901760
        %v339 = vsub.f32 %v337, %v338
        %v340 = vand.u32 %v339, 4294901760
        %341 = vmatpush.msra.mxu0 %v340
        %v342 = vand.u32 %v210, 4294901760
        %v343 = vsub.f32 %v210, %v342
        %v344 = vand.u32 %v343, 4294901760
        %v345 = vsub.f32 %v343, %v344
        %v346 = vand.u32 %v345, 4294901760
        %347 = vmatpush.msra.mxu0 %v346
        %v348 = vand.u32 %v248, 4294901760
        %349 = vmatmul.f32.gmra.mxu0 %v348
        %v350 = vpop.f32.mrf.mxu0
        %v351 = vadd.f32 %v286, %v350
        %v352 = vand.u32 %v251, 4294901760
        %353 = vmatmul.f32.gmra.mxu0 %v352
        %v354 = vpop.f32.mrf.mxu0
        %v355 = vadd.f32 %v294, %v354
        %v356 = vand.u32 %v254, 4294901760
        %357 = vmatmul.f32.gmra.mxu0 %v356
        %v358 = vpop.f32.mrf.mxu0
        %v359 = vadd.f32 %v302, %v358
        %v360 = vand.u32 %v257, 4294901760
        %361 = vmatmul.f32.gmra.mxu0 %v360
        %v362 = vpop.f32.mrf.mxu0
        %v363 = vadd.f32 %v310, %v362
        %364 = vdwg.mxu0
        %365 = vmatpush.msra.mxu0 0.0
        %366 = vmatpush.msra.mxu0 0.0
        %367 = vmatpush.msra.mxu0 0.0
        %368 = vmatpush.msra.mxu0 0.0
        %369 = vmatpush.msra.mxu0 0.0
        %370 = vmatpush.msra.mxu0 0.0
        %371 = vmatpush.msra.mxu0 0.0
        %372 = vmatpush.msra.mxu0 0.0
        %373 = vmatpush.msra.mxu0 0.0
        %374 = vmatpush.msra.mxu0 0.0
        %375 = vmatpush.msra.mxu0 0.0
        %376 = vmatpush.msra.mxu0 0.0
        %v377 = vand.u32 %v213, 4294901760
        %v378 = vsub.f32 %v213, %v377
        %379 = vmatpush.msra.mxu0 %v378
        %v380 = vand.u32 %v212, 4294901760
        %v381 = vsub.f32 %v212, %v380
        %382 = vmatpush.msra.mxu0 %v381
        %v383 = vand.u32 %v211, 4294901760
        %v384 = vsub.f32 %v211, %v383
        %385 = vmatpush.msra.mxu0 %v384
        %v386 = vand.u32 %v210, 4294901760
        %v387 = vsub.f32 %v210, %v386
        %388 = vmatpush.msra.mxu0 %v387
        %v389 = vand.u32 %v248, 4294901760
        %v390 = vsub.f32 %v248, %v389
        %391 = vmatmul.f32.gmra.mxu0 %v390
        %v392 = vpop.f32.mrf.mxu0
        %v393 = vadd.f32 %v351, %v392
        %v394 = vand.u32 %v251, 4294901760
        %v395 = vsub.f32 %v251, %v394
        %396 = vmatmul.f32.gmra.mxu0 %v395
        %v397 = vpop.f32.mrf.mxu0
        %v398 = vadd.f32 %v355, %v397
        %v399 = vand.u32 %v254, 4294901760
        %v400 = vsub.f32 %v254, %v399
        %401 = vmatmul.f32.gmra.mxu0 %v400
        %v402 = vpop.f32.mrf.mxu0
        %v403 = vadd.f32 %v359, %v402
        %v404 = vand.u32 %v257, 4294901760
        %v405 = vsub.f32 %v257, %v404
        %406 = vmatmul.f32.gmra.mxu0 %v405
        %v407 = vpop.f32.mrf.mxu0
        %v408 = vadd.f32 %v363, %v407
        %409 = vdwg.mxu0
        %410 = vmatpush.msra.mxu0 0.0
        %411 = vmatpush.msra.mxu0 0.0
        %412 = vmatpush.msra.mxu0 0.0
        %413 = vmatpush.msra.mxu0 0.0
        %414 = vmatpush.msra.mxu0 0.0
        %415 = vmatpush.msra.mxu0 0.0
        %416 = vmatpush.msra.mxu0 0.0
        %417 = vmatpush.msra.mxu0 0.0
        %418 = vmatpush.msra.mxu0 0.0
        %419 = vmatpush.msra.mxu0 0.0
        %420 = vmatpush.msra.mxu0 0.0
        %421 = vmatpush.msra.mxu0 0.0
        %v422 = vand.u32 %v213, 4294901760
        %423 = vmatpush.msra.mxu0 %v422
        %v424 = vand.u32 %v212, 4294901760
        %425 = vmatpush.msra.mxu0 %v424
        %v426 = vand.u32 %v211, 4294901760
        %427 = vmatpush.msra.mxu0 %v426
        %v428 = vand.u32 %v210, 4294901760
        %429 = vmatpush.msra.mxu0 %v428
        %v430 = vand.u32 %v248, 4294901760
        %v431 = vsub.f32 %v248, %v430
        %v432 = vand.u32 %v431, 4294901760
        %433 = vmatmul.f32.gmra.mxu0 %v432
        %v434 = vpop.f32.mrf.mxu0
        %v435 = vadd.f32 %v393, %v434
        %v436 = vand.u32 %v251, 4294901760
        %v437 = vsub.f32 %v251, %v436
        %v438 = vand.u32 %v437, 4294901760
        %439 = vmatmul.f32.gmra.mxu0 %v438
        %v440 = vpop.f32.mrf.mxu0
        %v441 = vadd.f32 %v398, %v440
        %v442 = vand.u32 %v254, 4294901760
        %v443 = vsub.f32 %v254, %v442
        %v444 = vand.u32 %v443, 4294901760
        %445 = vmatmul.f32.gmra.mxu0 %v444
        %v446 = vpop.f32.mrf.mxu0
        %v447 = vadd.f32 %v403, %v446
        %v448 = vand.u32 %v257, 4294901760
        %v449 = vsub.f32 %v257, %v448
        %v450 = vand.u32 %v449, 4294901760
        %451 = vmatmul.f32.gmra.mxu0 %v450
        %v452 = vpop.f32.mrf.mxu0
        %v453 = vadd.f32 %v408, %v452
        %454 = vdwg.mxu0
        %455 = vmatpush.msra.mxu0 0.0
        %456 = vmatpush.msra.mxu0 0.0
        %457 = vmatpush.msra.mxu0 0.0
        %458 = vmatpush.msra.mxu0 0.0
        %459 = vmatpush.msra.mxu0 0.0
        %460 = vmatpush.msra.mxu0 0.0
        %461 = vmatpush.msra.mxu0 0.0
        %462 = vmatpush.msra.mxu0 0.0
        %463 = vmatpush.msra.mxu0 0.0
        %464 = vmatpush.msra.mxu0 0.0
        %465 = vmatpush.msra.mxu0 0.0
        %466 = vmatpush.msra.mxu0 0.0
        %v467 = vand.u32 %v213, 4294901760
        %v468 = vsub.f32 %v213, %v467
        %v469 = vand.u32 %v468, 4294901760
        %470 = vmatpush.msra.mxu0 %v469
        %v471 = vand.u32 %v212, 4294901760
        %v472 = vsub.f32 %v212, %v471
        %v473 = vand.u32 %v472, 4294901760
        %474 = vmatpush.msra.mxu0 %v473
        %v475 = vand.u32 %v211, 4294901760
        %v476 = vsub.f32 %v211, %v475
        %v477 = vand.u32 %v476, 4294901760
        %478 = vmatpush.msra.mxu0 %v477
        %v479 = vand.u32 %v210, 4294901760
        %v480 = vsub.f32 %v210, %v479
        %v481 = vand.u32 %v480, 4294901760
        %482 = vmatpush.msra.mxu0 %v481
        %v483 = vand.u32 %v248, 4294901760
        %484 = vmatmul.f32.gmra.mxu0 %v483
        %v485 = vpop.f32.mrf.mxu0
        %v486 = vadd.f32 %v435, %v485
        %v487 = vand.u32 %v251, 4294901760
        %488 = vmatmul.f32.gmra.mxu0 %v487
        %v489 = vpop.f32.mrf.mxu0
        %v490 = vadd.f32 %v441, %v489
        %v491 = vand.u32 %v254, 4294901760
        %492 = vmatmul.f32.gmra.mxu0 %v491
        %v493 = vpop.f32.mrf.mxu0
        %v494 = vadd.f32 %v447, %v493
        %v495 = vand.u32 %v257, 4294901760
        %496 = vmatmul.f32.gmra.mxu0 %v495
        %v497 = vpop.f32.mrf.mxu0
        %v498 = vadd.f32 %v453, %v497
        %499 = vdwg.mxu0
        %500 = vmatpush.msra.mxu0 0.0
        %501 = vmatpush.msra.mxu0 0.0
        %502 = vmatpush.msra.mxu0 0.0
        %503 = vmatpush.msra.mxu0 0.0
        %504 = vmatpush.msra.mxu0 0.0
        %505 = vmatpush.msra.mxu0 0.0
        %506 = vmatpush.msra.mxu0 0.0
        %507 = vmatpush.msra.mxu0 0.0
        %508 = vmatpush.msra.mxu0 0.0
        %509 = vmatpush.msra.mxu0 0.0
        %510 = vmatpush.msra.mxu0 0.0
        %511 = vmatpush.msra.mxu0 0.0
        %v512 = vand.u32 %v213, 4294901760
        %513 = vmatpush.msra.mxu0 %v512
        %v514 = vand.u32 %v212, 4294901760
        %515 = vmatpush.msra.mxu0 %v514
        %v516 = vand.u32 %v211, 4294901760
        %517 = vmatpush.msra.mxu0 %v516
        %v518 = vand.u32 %v210, 4294901760
        %519 = vmatpush.msra.mxu0 %v518
        %v520 = vand.u32 %v248, 4294901760
        %521 = vmatmul.f32.gmra.mxu0 %v520
        %v522 = vpop.f32.mrf.mxu0
        %v523 = vadd.f32 %v486, %v522
        %v524 = vand.u32 %v251, 4294901760
        %525 = vmatmul.f32.gmra.mxu0 %v524
        %v526 = vpop.f32.mrf.mxu0
        %v527 = vadd.f32 %v490, %v526
        %v528 = vand.u32 %v254, 4294901760
        %529 = vmatmul.f32.gmra.mxu0 %v528
        %v530 = vpop.f32.mrf.mxu0
        %v531 = vadd.f32 %v494, %v530
        %v532 = vand.u32 %v257, 4294901760
        %533 = vmatmul.f32.gmra.mxu0 %v532
        %v534 = vpop.f32.mrf.mxu0
        %v535 = vadd.f32 %v498, %v534
        %536 = vdwg.mxu0
        %v537 = vmul.f32 %v523, 0.5
        %v538 = vmul.f32 %v527, 0.5
        %v539 = vmul.f32 %v531, 0.5
        %v540 = vmul.f32 %v535, 0.5
        %v541 = vmul.f32 %v523, 0.70710677
        %v542 = vmul.f32 %v527, 0.70710677
        %v543 = vmul.f32 %v531, 0.70710677
        %v544 = vmul.f32 %v535, 0.70710677
        %v545 = vmul.f32 %v541, %v541
        %v546 = vmin.f32 16.0, %v545
        %v547 = vmul.f32 %v546, 2.1237322e-06
        %v548 = vadd.f32 %v547, 0.00028619796
        %v549 = vmul.f32 %v546, %v548
        %v550 = vadd.f32 %v549, 0.0036580483
        %v551 = vmul.f32 %v546, %v550
        %v552 = vadd.f32 %v551, 0.05243302
        %v553 = vmul.f32 %v546, %v552
        %v554 = vadd.f32 %v553, 0.18741608
        %v555 = vmul.f32 %v546, %v554
        %v556 = vadd.f32 %v555, 1.1283791
        %v557 = vmul.f32 %v541, %v556
        %v558 = vmul.f32 %v546, 3.8918573e-05
        %v559 = vadd.f32 %v558, 0.001143296
        %v560 = vmul.f32 %v546, %v559
        %v561 = vadd.f32 %v560, 0.014752088
        %v562 = vmul.f32 %v546, %v561
        %v563 = vadd.f32 %v562, 0.112945676
        %v564 = vmul.f32 %v546, %v563
        %v565 = vadd.f32 %v564, 0.4994258
        %v566 = vmul.f32 %v546, %v565
        %v567 = vadd.f32 %v566, 1.0
        %v568 = vrcp.pop %v567
        %v569 = vmul.f32 %v567, %v568
        %v570 = vsub.f32 1.0, %v569
        %v571 = vmul.f32 %v568, %v570
        %v572 = vadd.f32 %v568, %v571
        %vm573 = vweird.f32 %v567
        %vm574 = vweird.f32 %v568
        %vm575 = vmor %vm573, %vm574
        %v576 = vsel %vm575, %v568, %v572
        %v577 = vand.u32 2147483647, %v567
        %vm578 = vcmp.eq.f32.partialorder %v577, 8.507059e+37
        %v579 = vand.u32 %v567, 2147483648
        %v580 = vor.u32 1.1754944e-38, %v579
        %v581 = vsel %vm578, %v580, %v576
        %v582 = vmul.f32 %v557, %v581
        %v583 = vmin.f32 %v582, 1.0
        %v584 = vmax.f32 %v583, -1.0
        %v585 = vmul.f32 %v542, %v542
        %v586 = vmin.f32 16.0, %v585
        %v587 = vmul.f32 %v586, 2.1237322e-06
        %v588 = vadd.f32 %v587, 0.00028619796
        %v589 = vmul.f32 %v586, %v588
        %v590 = vadd.f32 %v589, 0.0036580483
        %v591 = vmul.f32 %v586, %v590
        %v592 = vadd.f32 %v591, 0.05243302
        %v593 = vmul.f32 %v586, %v592
        %v594 = vadd.f32 %v593, 0.18741608
        %v595 = vmul.f32 %v586, %v594
        %v596 = vadd.f32 %v595, 1.1283791
        %v597 = vmul.f32 %v542, %v596
        %v598 = vmul.f32 %v586, 3.8918573e-05
        %v599 = vadd.f32 %v598, 0.001143296
        %v600 = vmul.f32 %v586, %v599
        %v601 = vadd.f32 %v600, 0.014752088
        %v602 = vmul.f32 %v586, %v601
        %v603 = vadd.f32 %v602, 0.112945676
        %v604 = vmul.f32 %v586, %v603
        %v605 = vadd.f32 %v604, 0.4994258
        %v606 = vmul.f32 %v586, %v605
        %v607 = vadd.f32 %v606, 1.0
        %v608 = vrcp.pop %v607
        %v609 = vmul.f32 %v607, %v608
        %v610 = vsub.f32 1.0, %v609
        %v611 = vmul.f32 %v608, %v610
        %v612 = vadd.f32 %v608, %v611
        %vm613 = vweird.f32 %v607
        %vm614 = vweird.f32 %v608
        %vm615 = vmor %vm613, %vm614
        %v616 = vsel %vm615, %v608, %v612
        %v617 = vand.u32 2147483647, %v607
        %vm618 = vcmp.eq.f32.partialorder %v617, 8.507059e+37
        %v619 = vand.u32 %v607, 2147483648
        %v620 = vor.u32 1.1754944e-38, %v619
        %v621 = vsel %vm618, %v620, %v616
        %v622 = vmul.f32 %v597, %v621
        %v623 = vmin.f32 %v622, 1.0
        %v624 = vmax.f32 %v623, -1.0
        %v625 = vmul.f32 %v543, %v543
        %v626 = vmin.f32 16.0, %v625
        %v627 = vmul.f32 %v626, 2.1237322e-06
        %v628 = vadd.f32 %v627, 0.00028619796
        %v629 = vmul.f32 %v626, %v628
        %v630 = vadd.f32 %v629, 0.0036580483
        %v631 = vmul.f32 %v626, %v630
        %v632 = vadd.f32 %v631, 0.05243302
        %v633 = vmul.f32 %v626, %v632
        %v634 = vadd.f32 %v633, 0.18741608
        %v635 = vmul.f32 %v626, %v634
        %v636 = vadd.f32 %v635, 1.1283791
        %v637 = vmul.f32 %v543, %v636
        %v638 = vmul.f32 %v626, 3.8918573e-05
        %v639 = vadd.f32 %v638, 0.001143296
        %v640 = vmul.f32 %v626, %v639
        %v641 = vadd.f32 %v640, 0.014752088
        %v642 = vmul.f32 %v626, %v641
        %v643 = vadd.f32 %v642, 0.112945676
        %v644 = vmul.f32 %v626, %v643
        %v645 = vadd.f32 %v644, 0.4994258
        %v646 = vmul.f32 %v626, %v645
        %v647 = vadd.f32 %v646, 1.0
        %v648 = vrcp.pop %v647
        %v649 = vmul.f32 %v647, %v648
        %v650 = vsub.f32 1.0, %v649
        %v651 = vmul.f32 %v648, %v650
        %v652 = vadd.f32 %v648, %v651
        %vm653 = vweird.f32 %v647
        %vm654 = vweird.f32 %v648
        %vm655 = vmor %vm653, %vm654
        %v656 = vsel %vm655, %v648, %v652
        %v657 = vand.u32 2147483647, %v647
        %vm658 = vcmp.eq.f32.partialorder %v657, 8.507059e+37
        %v659 = vand.u32 %v647, 2147483648
        %v660 = vor.u32 1.1754944e-38, %v659
        %v661 = vsel %vm658, %v660, %v656
        %v662 = vmul.f32 %v637, %v661
        %v663 = vmin.f32 %v662, 1.0
        %v664 = vmax.f32 %v663, -1.0
        %v665 = vmul.f32 %v544, %v544
        %v666 = vmin.f32 16.0, %v665
        %v667 = vmul.f32 %v666, 2.1237322e-06
        %v668 = vadd.f32 %v667, 0.00028619796
        %v669 = vmul.f32 %v666, %v668
        %v670 = vadd.f32 %v669, 0.0036580483
        %v671 = vmul.f32 %v666, %v670
        %v672 = vadd.f32 %v671, 0.05243302
        %v673 = vmul.f32 %v666, %v672
        %v674 = vadd.f32 %v673, 0.18741608
        %v675 = vmul.f32 %v666, %v674
        %v676 = vadd.f32 %v675, 1.1283791
        %v677 = vmul.f32 %v544, %v676
        %v678 = vmul.f32 %v666, 3.8918573e-05
        %v679 = vadd.f32 %v678, 0.001143296
        %v680 = vmul.f32 %v666, %v679
        %v681 = vadd.f32 %v680, 0.014752088
        %v682 = vmul.f32 %v666, %v681
        %v683 = vadd.f32 %v682, 0.112945676
        %v684 = vmul.f32 %v666, %v683
        %v685 = vadd.f32 %v684, 0.4994258
        %v686 = vmul.f32 %v666, %v685
        %v687 = vadd.f32 %v686, 1.0
        %v688 = vrcp.pop %v687
        %v689 = vmul.f32 %v687, %v688
        %v690 = vsub.f32 1.0, %v689
        %v691 = vmul.f32 %v688, %v690
        %v692 = vadd.f32 %v688, %v691
        %vm693 = vweird.f32 %v687
        %vm694 = vweird.f32 %v688
        %vm695 = vmor %vm693, %vm694
        %v696 = vsel %vm695, %v688, %v692
        %v697 = vand.u32 2147483647, %v687
        %vm698 = vcmp.eq.f32.partialorder %v697, 8.507059e+37
        %v699 = vand.u32 %v687, 2147483648
        %v700 = vor.u32 1.1754944e-38, %v699
        %v701 = vsel %vm698, %v700, %v696
        %v702 = vmul.f32 %v677, %v701
        %v703 = vmin.f32 %v702, 1.0
        %v704 = vmax.f32 %v703, -1.0
        %v705 = vadd.f32 %v584, 1.0
        %v706 = vadd.f32 %v624, 1.0
        %v707 = vadd.f32 %v664, 1.0
        %v708 = vadd.f32 %v704, 1.0
        %v709 = vmul.f32 %v537, %v705
        %v710 = vmul.f32 %v538, %v706
        %v711 = vmul.f32 %v539, %v707
        %v712 = vmul.f32 %v540, %v708
        %v714 = vsel %vm246, %v206, 0
        %v717 = vsel %vm246, %v207, 0
        %v720 = vsel %vm246, %v208, 0
        %v723 = vsel %vm246, %v209, 0
        %725 = vmatpush.msra.mxu0 0.0
        %726 = vmatpush.msra.mxu0 0.0
        %727 = vmatpush.msra.mxu0 0.0
        %728 = vmatpush.msra.mxu0 0.0
        %729 = vmatpush.msra.mxu0 0.0
        %730 = vmatpush.msra.mxu0 0.0
        %731 = vmatpush.msra.mxu0 0.0
        %732 = vmatpush.msra.mxu0 0.0
        %733 = vmatpush.msra.mxu0 0.0
        %734 = vmatpush.msra.mxu0 0.0
        %735 = vmatpush.msra.mxu0 0.0
        %736 = vmatpush.msra.mxu0 0.0
        %v737 = vand.u32 %v712, 4294901760
        %738 = vmatpush.msra.mxu0 %v737
        %v739 = vand.u32 %v711, 4294901760
        %740 = vmatpush.msra.mxu0 %v739
        %v741 = vand.u32 %v710, 4294901760
        %742 = vmatpush.msra.mxu0 %v741
        %v743 = vand.u32 %v709, 4294901760
        %744 = vmatpush.msra.mxu0 %v743
        %v745 = vand.u32 %v714, 4294901760
        %v746 = vsub.f32 %v714, %v745
        %v747 = vand.u32 %v746, 4294901760
        %v748 = vsub.f32 %v746, %v747
        %v749 = vand.u32 %v748, 4294901760
        %750 = vmatmul.f32.gmra.mxu0 %v749
        %v751 = vpop.f32.mrf.mxu0
        %v752 = vadd.f32 0.0, %v751
        %v753 = vand.u32 %v717, 4294901760
        %v754 = vsub.f32 %v717, %v753
        %v755 = vand.u32 %v754, 4294901760
        %v756 = vsub.f32 %v754, %v755
        %v757 = vand.u32 %v756, 4294901760
        %758 = vmatmul.f32.gmra.mxu0 %v757
        %v759 = vpop.f32.mrf.mxu0
        %v760 = vadd.f32 0.0, %v759
        %v761 = vand.u32 %v720, 4294901760
        %v762 = vsub.f32 %v720, %v761
        %v763 = vand.u32 %v762, 4294901760
        %v764 = vsub.f32 %v762, %v763
        %v765 = vand.u32 %v764, 4294901760
        %766 = vmatmul.f32.gmra.mxu0 %v765
        %v767 = vpop.f32.mrf.mxu0
        %v768 = vadd.f32 0.0, %v767
        %v769 = vand.u32 %v723, 4294901760
        %v770 = vsub.f32 %v723, %v769
        %v771 = vand.u32 %v770, 4294901760
        %v772 = vsub.f32 %v770, %v771
        %v773 = vand.u32 %v772, 4294901760
        %774 = vmatmul.f32.gmra.mxu0 %v773
        %v775 = vpop.f32.mrf.mxu0
        %v776 = vadd.f32 0.0, %v775
        %777 = vdwg.mxu0
        %778 = vmatpush.msra.mxu0 0.0
        %779 = vmatpush.msra.mxu0 0.0
        %780 = vmatpush.msra.mxu0 0.0
        %781 = vmatpush.msra.mxu0 0.0
        %782 = vmatpush.msra.mxu0 0.0
        %783 = vmatpush.msra.mxu0 0.0
        %784 = vmatpush.msra.mxu0 0.0
        %785 = vmatpush.msra.mxu0 0.0
        %786 = vmatpush.msra.mxu0 0.0
        %787 = vmatpush.msra.mxu0 0.0
        %788 = vmatpush.msra.mxu0 0.0
        %789 = vmatpush.msra.mxu0 0.0
        %v790 = vand.u32 %v712, 4294901760
        %v791 = vsub.f32 %v712, %v790
        %v792 = vand.u32 %v791, 4294901760
        %v793 = vsub.f32 %v791, %v792
        %v794 = vand.u32 %v793, 4294901760
        %795 = vmatpush.msra.mxu0 %v794
        %v796 = vand.u32 %v711, 4294901760
        %v797 = vsub.f32 %v711, %v796
        %v798 = vand.u32 %v797, 4294901760
        %v799 = vsub.f32 %v797, %v798
        %v800 = vand.u32 %v799, 4294901760
        %801 = vmatpush.msra.mxu0 %v800
        %v802 = vand.u32 %v710, 4294901760
        %v803 = vsub.f32 %v710, %v802
        %v804 = vand.u32 %v803, 4294901760
        %v805 = vsub.f32 %v803, %v804
        %v806 = vand.u32 %v805, 4294901760
        %807 = vmatpush.msra.mxu0 %v806
        %v808 = vand.u32 %v709, 4294901760
        %v809 = vsub.f32 %v709, %v808
        %v810 = vand.u32 %v809, 4294901760
        %v811 = vsub.f32 %v809, %v810
        %v812 = vand.u32 %v811, 4294901760
        %813 = vmatpush.msra.mxu0 %v812
        %v814 = vand.u32 %v714, 4294901760
        %815 = vmatmul.f32.gmra.mxu0 %v814
        %v816 = vpop.f32.mrf.mxu0
        %v817 = vadd.f32 %v752, %v816
        %v818 = vand.u32 %v717, 4294901760
        %819 = vmatmul.f32.gmra.mxu0 %v818
        %v820 = vpop.f32.mrf.mxu0
        %v821 = vadd.f32 %v760, %v820
        %v822 = vand.u32 %v720, 4294901760
        %823 = vmatmul.f32.gmra.mxu0 %v822
        %v824 = vpop.f32.mrf.mxu0
        %v825 = vadd.f32 %v768, %v824
        %v826 = vand.u32 %v723, 4294901760
        %827 = vmatmul.f32.gmra.mxu0 %v826
        %v828 = vpop.f32.mrf.mxu0
        %v829 = vadd.f32 %v776, %v828
        %830 = vdwg.mxu0
        %831 = vmatpush.msra.mxu0 0.0
        %832 = vmatpush.msra.mxu0 0.0
        %833 = vmatpush.msra.mxu0 0.0
        %834 = vmatpush.msra.mxu0 0.0
        %835 = vmatpush.msra.mxu0 0.0
        %836 = vmatpush.msra.mxu0 0.0
        %837 = vmatpush.msra.mxu0 0.0
        %838 = vmatpush.msra.mxu0 0.0
        %839 = vmatpush.msra.mxu0 0.0
        %840 = vmatpush.msra.mxu0 0.0
        %841 = vmatpush.msra.mxu0 0.0
        %842 = vmatpush.msra.mxu0 0.0
        %v843 = vand.u32 %v712, 4294901760
        %v844 = vsub.f32 %v712, %v843
        %845 = vmatpush.msra.mxu0 %v844
        %v846 = vand.u32 %v711, 4294901760
        %v847 = vsub.f32 %v711, %v846
        %848 = vmatpush.msra.mxu0 %v847
        %v849 = vand.u32 %v710, 4294901760
        %v850 = vsub.f32 %v710, %v849
        %851 = vmatpush.msra.mxu0 %v850
        %v852 = vand.u32 %v709, 4294901760
        %v853 = vsub.f32 %v709, %v852
        %854 = vmatpush.msra.mxu0 %v853
        %v855 = vand.u32 %v714, 4294901760
        %v856 = vsub.f32 %v714, %v855
        %857 = vmatmul.f32.gmra.mxu0 %v856
        %v858 = vpop.f32.mrf.mxu0
        %v859 = vadd.f32 %v817, %v858
        %v860 = vand.u32 %v717, 4294901760
        %v861 = vsub.f32 %v717, %v860
        %862 = vmatmul.f32.gmra.mxu0 %v861
        %v863 = vpop.f32.mrf.mxu0
        %v864 = vadd.f32 %v821, %v863
        %v865 = vand.u32 %v720, 4294901760
        %v866 = vsub.f32 %v720, %v865
        %867 = vmatmul.f32.gmra.mxu0 %v866
        %v868 = vpop.f32.mrf.mxu0
        %v869 = vadd.f32 %v825, %v868
        %v870 = vand.u32 %v723, 4294901760
        %v871 = vsub.f32 %v723, %v870
        %872 = vmatmul.f32.gmra.mxu0 %v871
        %v873 = vpop.f32.mrf.mxu0
        %v874 = vadd.f32 %v829, %v873
        %875 = vdwg.mxu0
        %876 = vmatpush.msra.mxu0 0.0
        %877 = vmatpush.msra.mxu0 0.0
        %878 = vmatpush.msra.mxu0 0.0
        %879 = vmatpush.msra.mxu0 0.0
        %880 = vmatpush.msra.mxu0 0.0
        %881 = vmatpush.msra.mxu0 0.0
        %882 = vmatpush.msra.mxu0 0.0
        %883 = vmatpush.msra.mxu0 0.0
        %884 = vmatpush.msra.mxu0 0.0
        %885 = vmatpush.msra.mxu0 0.0
        %886 = vmatpush.msra.mxu0 0.0
        %887 = vmatpush.msra.mxu0 0.0
        %v888 = vand.u32 %v712, 4294901760
        %889 = vmatpush.msra.mxu0 %v888
        %v890 = vand.u32 %v711, 4294901760
        %891 = vmatpush.msra.mxu0 %v890
        %v892 = vand.u32 %v710, 4294901760
        %893 = vmatpush.msra.mxu0 %v892
        %v894 = vand.u32 %v709, 4294901760
        %895 = vmatpush.msra.mxu0 %v894
        %v896 = vand.u32 %v714, 4294901760
        %v897 = vsub.f32 %v714, %v896
        %v898 = vand.u32 %v897, 4294901760
        %899 = vmatmul.f32.gmra.mxu0 %v898
        %v900 = vpop.f32.mrf.mxu0
        %v901 = vadd.f32 %v859, %v900
        %v902 = vand.u32 %v717, 4294901760
        %v903 = vsub.f32 %v717, %v902
        %v904 = vand.u32 %v903, 4294901760
        %905 = vmatmul.f32.gmra.mxu0 %v904
        %v906 = vpop.f32.mrf.mxu0
        %v907 = vadd.f32 %v864, %v906
        %v908 = vand.u32 %v720, 4294901760
        %v909 = vsub.f32 %v720, %v908
        %v910 = vand.u32 %v909, 4294901760
        %911 = vmatmul.f32.gmra.mxu0 %v910
        %v912 = vpop.f32.mrf.mxu0
        %v913 = vadd.f32 %v869, %v912
        %v914 = vand.u32 %v723, 4294901760
        %v915 = vsub.f32 %v723, %v914
        %v916 = vand.u32 %v915, 4294901760
        %917 = vmatmul.f32.gmra.mxu0 %v916
        %v918 = vpop.f32.mrf.mxu0
        %v919 = vadd.f32 %v874, %v918
        %920 = vdwg.mxu0
        %921 = vmatpush.msra.mxu0 0.0
        %922 = vmatpush.msra.mxu0 0.0
        %923 = vmatpush.msra.mxu0 0.0
        %924 = vmatpush.msra.mxu0 0.0
        %925 = vmatpush.msra.mxu0 0.0
        %926 = vmatpush.msra.mxu0 0.0
        %927 = vmatpush.msra.mxu0 0.0
        %928 = vmatpush.msra.mxu0 0.0
        %929 = vmatpush.msra.mxu0 0.0
        %930 = vmatpush.msra.mxu0 0.0
        %931 = vmatpush.msra.mxu0 0.0
        %932 = vmatpush.msra.mxu0 0.0
        %v933 = vand.u32 %v712, 4294901760
        %v934 = vsub.f32 %v712, %v933
        %v935 = vand.u32 %v934, 4294901760
        %936 = vmatpush.msra.mxu0 %v935
        %v937 = vand.u32 %v711, 4294901760
        %v938 = vsub.f32 %v711, %v937
        %v939 = vand.u32 %v938, 4294901760
        %940 = vmatpush.msra.mxu0 %v939
        %v941 = vand.u32 %v710, 4294901760
        %v942 = vsub.f32 %v710, %v941
        %v943 = vand.u32 %v942, 4294901760
        %944 = vmatpush.msra.mxu0 %v943
        %v945 = vand.u32 %v709, 4294901760
        %v946 = vsub.f32 %v709, %v945
        %v947 = vand.u32 %v946, 4294901760
        %948 = vmatpush.msra.mxu0 %v947
        %v949 = vand.u32 %v714, 4294901760
        %950 = vmatmul.f32.gmra.mxu0 %v949
        %v951 = vpop.f32.mrf.mxu0
        %v952 = vadd.f32 %v901, %v951
        %v953 = vand.u32 %v717, 4294901760
        %954 = vmatmul.f32.gmra.mxu0 %v953
        %v955 = vpop.f32.mrf.mxu0
        %v956 = vadd.f32 %v907, %v955
        %v957 = vand.u32 %v720, 4294901760
        %958 = vmatmul.f32.gmra.mxu0 %v957
        %v959 = vpop.f32.mrf.mxu0
        %v960 = vadd.f32 %v913, %v959
        %v961 = vand.u32 %v723, 4294901760
        %962 = vmatmul.f32.gmra.mxu0 %v961
        %v963 = vpop.f32.mrf.mxu0
        %v964 = vadd.f32 %v919, %v963
        %965 = vdwg.mxu0
        %966 = vmatpush.msra.mxu0 0.0
        %967 = vmatpush.msra.mxu0 0.0
        %968 = vmatpush.msra.mxu0 0.0
        %969 = vmatpush.msra.mxu0 0.0
        %970 = vmatpush.msra.mxu0 0.0
        %971 = vmatpush.msra.mxu0 0.0
        %972 = vmatpush.msra.mxu0 0.0
        %973 = vmatpush.msra.mxu0 0.0
        %974 = vmatpush.msra.mxu0 0.0
        %975 = vmatpush.msra.mxu0 0.0
        %976 = vmatpush.msra.mxu0 0.0
        %977 = vmatpush.msra.mxu0 0.0
        %v978 = vand.u32 %v712, 4294901760
        %979 = vmatpush.msra.mxu0 %v978
        %v980 = vand.u32 %v711, 4294901760
        %981 = vmatpush.msra.mxu0 %v980
        %v982 = vand.u32 %v710, 4294901760
        %983 = vmatpush.msra.mxu0 %v982
        %v984 = vand.u32 %v709, 4294901760
        %985 = vmatpush.msra.mxu0 %v984
        %v986 = vand.u32 %v714, 4294901760
        %987 = vmatmul.f32.gmra.mxu0 %v986
        %v988 = vpop.f32.mrf.mxu0
        %v989 = vadd.f32 %v952, %v988
        %v990 = vand.u32 %v717, 4294901760
        %991 = vmatmul.f32.gmra.mxu0 %v990
        %v992 = vpop.f32.mrf.mxu0
        %v993 = vadd.f32 %v956, %v992
        %v994 = vand.u32 %v720, 4294901760
        %995 = vmatmul.f32.gmra.mxu0 %v994
        %v996 = vpop.f32.mrf.mxu0
        %v997 = vadd.f32 %v960, %v996
        %v998 = vand.u32 %v723, 4294901760
        %999 = vmatmul.f32.gmra.mxu0 %v998
        %v1000 = vpop.f32.mrf.mxu0
        %v1001 = vadd.f32 %v964, %v1000
        %1002 = vdwg.mxu0
        %1003 = vst [vmem:[%s205] sm:$0xff] %v989
        %1004 = vst [vmem:[%s205 + $0x8] sm:$0xff] %v993
        %1005 = vst [vmem:[%s205 + $0x10] sm:$0xff] %v997
        %1006 = vst [vmem:[%s205 + $0x18] sm:$0xff] %v1001
        %s1007 = sand.u32 %s82, 1
        %s1008 = scalar_lea.sflag [#allocation4], %s1007
        %s1009 = sand.u32 %s82, 1
        %s1010 = smul.addr %s1009, 32
        %s1011 = scalar_lea.vmem [#allocation7], %s1010
        // Predicated region
        $region37: #{tpu_custom_call.1} parent=27 // pred_check
          %p1012 = pneg %p92
        $region38: #{tpu_custom_call.1} parent=27 // pred_check_branch
          %1014 = sbr.rel (%p1012) target = $region40
        $region39: #{tpu_custom_call.1} parent=27 // pred_region
          %1016 = vsyncadd %s1008, 0
          %s1017 = smul.addr %s22, 4
          %s1018 = smul.addr %s1017, 8
          %s1019 = scalar_lea.hbm %s2, %s1018
          %s1020 = sshll.u32 %s1011, 4
          %s1021 = int_to_ptr.vmem [resolvable:$true] %s1020
          %s1022 = sshll.u32 %s1019, 4
          %s1023 = int_to_ptr.hbm [resolvable:$true] %s1022
          %1028 = dma.vmem_to_hbm [thread:$0]  %s1021, 512, %s1023, %s1008, 128, 128, 8
        $region40: #{tpu_custom_call.1} parent=27 // pred_fallthru
          _
      $region28: #{tpu_custom_call.1} parent=5 // pred_fallthru
        _
      %p1029 = scmp.le.s32.totalorder 2, %s17
      // Predicated region
      $region41: #{tpu_custom_call.1} parent=5 // pred_check
        %p1030 = pneg %p1029
      $region42: #{tpu_custom_call.1} parent=5 // pred_check_branch
        %1032 = sbr.rel (%p1030) target = $region44
      $region43: #{tpu_custom_call.1} parent=5 // pred_region
        %s1033 = ssub.s32 %s17, 2
        // Predicated region
        $region45: #{tpu_custom_call.1} parent=43 // pred_check
          %p1034 = pneg %p98
        $region46: #{tpu_custom_call.1} parent=43 // pred_check_branch
          %1036 = sbr.rel (%p1034) target = $region48
        $region47: #{tpu_custom_call.1} parent=43 // pred_region
          %s1037 = sand.u32 %s83, 1
          %s1038 = scalar_lea.sflag [#allocation4], %s1037
          %s1039 = sand.u32 %s83, 1
          %s1040 = smul.addr %s1039, 32
          %s1041 = scalar_lea.vmem [#allocation7], %s1040
          %1043 = dma.done %s1038, 512
        $region48: #{tpu_custom_call.1} parent=43 // pred_fallthru
          _
      $region44: #{tpu_custom_call.1} parent=5 // pred_fallthru
        _
    $region6: #{tpu_custom_call.1} parent=1 // loop_footer
      %s21 = sadd.s32 1, %s17
    $region7: #{tpu_custom_call.1} parent=1 // loop_footer_branch
      %16 = sbr.rel target = $region3
    $region8: #{tpu_custom_call.1} parent=1 // loop_exit
      _
    %1044 = vsyncpa [#allocation3], 1
    %s1045 = scalar_lea.sflag [#allocation3], 1
    %1046 = vsyncpa %s1045, 1
    %1047 = vsyncpa [#allocation6], 1
    %s1048 = scalar_lea.sflag [#allocation6], 1
    %1049 = vsyncpa %s1048, 1
    %1050 = vsyncpa [#allocation4], 1
    %s1051 = scalar_lea.sflag [#allocation4], 1
    %1052 = vsyncpa %s1051, 1

</llo_original>
